<compile_context>
chip_gen: v7x
topology: tpu7x:2x2x1
jax: 0.10.0
libtpu: 0.0.40
codegen_flags: <defaults>
</compile_context>

<pallas_src>
import jax
import jax.numpy as jnp
from jax.experimental import pallas as pl
from jax.experimental.pallas import tpu as pltpu

_BN_EPS = 1e-5


def _bn_relu_fused(h, gamma, beta):
    """Training-mode BatchNorm1d (biased batch stats) + ReLU, fused one-pass.

    h: (B, F) f32, gamma/beta: (1, F) f32.
    var = E[h^2] - mean^2 (clamped to >= 0 against f32 cancellation) so the two
    cross-sublane reductions are independent; gamma*rsqrt(var+eps) and
    beta-mean*scale fold into a single scale + shift.
    """
    inv_n = 1.0 / h.shape[0]
    mean = jnp.sum(h, axis=0, keepdims=True) * inv_n
    mean_sq = jnp.sum(h * h, axis=0, keepdims=True) * inv_n
    var = jnp.maximum(mean_sq - mean * mean, 0.0)
    scale = gamma * jax.lax.rsqrt(var + _BN_EPS)
    shift = beta - mean * scale
    return jnp.maximum(h * scale + shift, 0.0)


def discriminator2_kernel(
    x_ref,          # (B, in_dim)  f32   (cast to bf16 in-kernel)
    w1_ref,         # (in_dim, 256) bf16
    w2_ref,         # (256, 256)    bf16
    w3_ref,         # (256, 128)    bf16
    p_ref,          # (8, 256) f32 packed: g1,be1,g2,be2,g3,be3,w4,b4(bcast)
    o_ref,          # (B, 128) f32 lane-dense slab; every column is the result
):
    x = x_ref[...].astype(jnp.bfloat16)

    # Unpack the per-feature parameter slab (one DMA, static slices).
    p = p_ref[...]                               # (8, 256) f32
    g1, be1 = p[0:1, :],     p[1:2, :]
    g2, be2 = p[2:3, :],     p[3:4, :]
    g3, be3 = p[4:5, 0:128], p[5:6, 0:128]
    w4_row  = p[6:7, 0:128]                      # (1, 128)
    b4_row  = p[7:8, 0:128]                      # (1, 128), scalar b4 broadcast

    # Block 1: Linear(in_dim, 256) [bias cancelled by train-mode BN] + BN + ReLU
    h = jnp.dot(x, w1_ref[...], preferred_element_type=jnp.float32)
    h = _bn_relu_fused(h, g1, be1)

    # Block 2: Linear(256, 256) + BN + ReLU
    h = jnp.dot(h.astype(jnp.bfloat16), w2_ref[...],
                preferred_element_type=jnp.float32)
    h = _bn_relu_fused(h, g2, be2)

    # Block 3: Linear(256, 128) + BN + ReLU
    h = jnp.dot(h.astype(jnp.bfloat16), w3_ref[...],
                preferred_element_type=jnp.float32)
    h = _bn_relu_fused(h, g3, be3)

    # Head: Linear(128, 1) + Sigmoid on VPU + XLU (no MXU push for N=1).
    # (B,1) logits + (1,128) bias row broadcasts straight to the lane-dense
    # output slab (all 128 columns identical) -> unmasked vst, no extra
    # broadcast op, no wrapper-side slice launch required.
    logits = jnp.sum(h * w4_row, axis=-1, keepdims=True) + b4_row    # (B, 128)
    o_ref[...] = jax.nn.sigmoid(logits).astype(o_ref.dtype)


def prepare_params(params):
    """One-time conversion of module-faithful f32 params into kernel-ready form.

    Do this ONCE (e.g. after init / checkpoint load), not per forward:
      * w1/w2/w3 stored bf16 (MXU operands),
      * g/beta/w4/b4 packed into one contiguous (8, 256) f32 slab.
    """
    pack = jnp.zeros((8, 256), jnp.float32)
    pack = pack.at[0, :].set(params["g1"][0])
    pack = pack.at[1, :].set(params["be1"][0])
    pack = pack.at[2, :].set(params["g2"][0])
    pack = pack.at[3, :].set(params["be2"][0])
    pack = pack.at[4, :128].set(params["g3"][0])
    pack = pack.at[5, :128].set(params["be3"][0])
    pack = pack.at[6, :128].set(params["w4"][:, 0])
    pack = pack.at[7, :128].set(params["b4"][0, 0])   # scalar, lane-broadcast
    return dict(
        w1=params["w1"].astype(jnp.bfloat16),
        w2=params["w2"].astype(jnp.bfloat16),
        w3=params["w3"].astype(jnp.bfloat16),
        pack=pack,
    )


def discriminator2_forward_slab(x, prepped):
    """x: (B, in_dim) f32; prepped: output of prepare_params.

    Returns a (B, 128) f32 lane-dense slab whose 128 columns are all equal to
    sigmoid(logits); consumers should read column 0 (avoids an extra slice op
    on this overhead-bound path).
    """
    batch = x.shape[0]

    # Everything is tiny (a few hundred KiB) -> single full block per array in
    # VMEM; no grid, no index_maps.
    vmem = pl.BlockSpec(memory_space=pltpu.MemorySpace.VMEM)

    return pl.pallas_call(
        discriminator2_kernel,
        out_shape=jax.ShapeDtypeStruct((batch, 128), jnp.float32),
        in_specs=[vmem] * 5,
        out_specs=vmem,
    )(x, prepped["w1"], prepped["w2"], prepped["w3"], prepped["pack"])


def discriminator2_forward(x, prepped):
    """Module-faithful (B, 1) output (thin view over the lane-dense slab)."""
    return discriminator2_forward_slab(x, prepped)[:, :1]


def init_params(key, in_dim):
    """Deterministic synthetic parameters matching Discriminator2.__init__ shapes
    (module-faithful f32, biases included)."""
    ks = jax.random.split(key, 12)

    def lin(kw, kb, fan_in, fan_out):
        bound = 1.0 / jnp.sqrt(jnp.float32(fan_in))
        w = jax.random.uniform(kw, (fan_in, fan_out), jnp.float32, -bound, bound)
        b = jax.random.uniform(kb, (1, fan_out), jnp.float32, -bound, bound)
        return w, b

    def bn(kg, kb, feat):
        g = 1.0 + 0.1 * jax.random.normal(kg, (1, feat), jnp.float32)
        b = 0.1 * jax.random.normal(kb, (1, feat), jnp.float32)
        return g, b

    w1, b1 = lin(ks[0], ks[1], in_dim, 256)
    g1, be1 = bn(ks[2], ks[3], 256)
    w2, b2 = lin(ks[4], ks[5], 256, 256)
    g2, be2 = bn(ks[6], ks[7], 256)
    w3, b3 = lin(ks[8], ks[9], 256, 128)
    g3, be3 = bn(ks[10], ks[11], 128)
    kw4, kb4 = jax.random.split(jax.random.fold_in(key, 99))
    w4, b4 = lin(kw4, kb4, 128, 1)

    return dict(
        w1=w1, b1=b1, g1=g1, be1=be1,
        w2=w2, b2=b2, g2=g2, be2=be2,
        w3=w3, b3=b3, g3=g3, be3=be3,
        w4=w4, b4=b4,
    )


def reference_forward_f32(x, params):
    """Pure-JAX f32 reference faithful to the PyTorch module (with biases)."""
    def bn_relu(h, g, b):
        m = jnp.mean(h, axis=0, keepdims=True)
        v = jnp.mean((h - m) ** 2, axis=0, keepdims=True)
        return jnp.maximum((h - m) / jnp.sqrt(v + _BN_EPS) * g + b, 0.0)

    h = bn_relu(x @ params["w1"] + params["b1"], params["g1"], params["be1"])
    h = bn_relu(h @ params["w2"] + params["b2"], params["g2"], params["be2"])
    h = bn_relu(h @ params["w3"] + params["b3"], params["g3"], params["be3"])
    return jax.nn.sigmoid(h @ params["w4"] + params["b4"])


def reference_forward_matched(x, params):
    """Reference using the same numerics as the kernel (bf16 dot operands,
    f32 accumulation, bias-free pre-BN linears, fused clamped one-pass BN)."""
    def bn_relu_fused(h, g, b):
        n = h.shape[0]
        mean = jnp.sum(h, axis=0, keepdims=True) / n
        var = jnp.maximum(jnp.sum(h * h, axis=0, keepdims=True) / n - mean * mean, 0.0)
        scale = g * jax.lax.rsqrt(var + _BN_EPS)
        return jnp.maximum(h * scale + (b - mean * scale), 0.0)

    h = jnp.dot(x.astype(jnp.bfloat16), params["w1"].astype(jnp.bfloat16),
                preferred_element_type=jnp.float32)
    h = bn_relu_fused(h, params["g1"], params["be1"])
    h = jnp.dot(h.astype(jnp.bfloat16), params["w2"].astype(jnp.bfloat16),
                preferred_element_type=jnp.float32)
    h = bn_relu_fused(h, params["g2"], params["be2"])
    h = jnp.dot(h.astype(jnp.bfloat16), params["w3"].astype(jnp.bfloat16),
                preferred_element_type=jnp.float32)
    h = bn_relu_fused(h, params["g3"], params["be3"])
    logits = jnp.sum(h * params["w4"].reshape(1, -1), axis=-1, keepdims=True)
    return jax.nn.sigmoid(logits + params["b4"])


if __name__ == "__main__":
    key = jax.random.PRNGKey(0)
    batch, in_dim = 8, 32
    kx, kp = jax.random.split(key)
    x = jax.random.normal(kx, (batch, in_dim), jnp.float32)
    params = init_params(kp, in_dim)
    prepped = prepare_params(params)   # one-time bf16 weight + param-slab pack

    out_slab = discriminator2_forward_slab(x, prepped)     # (B, 128)
    out_slab = jax.block_until_ready(out_slab)
    assert out_slab.shape == (batch, 128)

    # Consumer reads column 0 of the lane-dense slab (all columns identical).
    out = out_slab[:, :1]
    assert out.shape == (batch, 1)
    assert jnp.allclose(out_slab, jnp.broadcast_to(out, out_slab.shape))

    # Tight check against a numerically-matched JAX reference.
    ref_m = reference_forward_matched(x, params)
    assert jnp.allclose(out, ref_m, atol=2e-3, rtol=2e-3), (out, ref_m)

    # Looser check against the module-faithful f32 reference (bf16 matmul
    # operands + dead-bias removal introduce only tiny deviations).
    ref_f = reference_forward_f32(x, params)
    assert jnp.allclose(out, ref_f, atol=5e-2, rtol=5e-2), (out, ref_f)

    print("KERNEL_OK")
</pallas_src>

<mosaic_0001>
module attributes {stable_mosaic.version = 11 : i64} {
  func.func @discriminator2_kernel(%arg0: memref<8x32xf32, #tpu.memory_space<vmem>>, %arg1: memref<32x256xbf16, #tpu.memory_space<vmem>>, %arg2: memref<256x256xbf16, #tpu.memory_space<vmem>>, %arg3: memref<256x128xbf16, #tpu.memory_space<vmem>>, %arg4: memref<8x256xf32, #tpu.memory_space<vmem>>, %arg5: memref<8x128xf32, #tpu.memory_space<vmem>>) attributes {dimension_semantics = [], scalar_prefetch = 0 : i64, scratch_operands = 0 : i64, tpu.core_type = #tpu.core_type<tc>} {
    %c0 = arith.constant 0 : index
    %c0_0 = arith.constant 0 : index
    %0 = vector.load %arg0[%c0, %c0_0] : memref<8x32xf32, #tpu.memory_space<vmem>>, vector<8x32xf32>
    %1 = arith.truncf %0 : vector<8x32xf32> to vector<8x32xbf16>
    %c0_1 = arith.constant 0 : index
    %c0_2 = arith.constant 0 : index
    %2 = vector.load %arg4[%c0_1, %c0_2] : memref<8x256xf32, #tpu.memory_space<vmem>>, vector<8x256xf32>
    %3 = vector.extract_strided_slice %2 {offsets = [0, 0], sizes = [1, 256], strides = [1, 1]} : vector<8x256xf32> to vector<1x256xf32>
    %4 = vector.extract_strided_slice %2 {offsets = [1, 0], sizes = [1, 256], strides = [1, 1]} : vector<8x256xf32> to vector<1x256xf32>
    %5 = vector.extract_strided_slice %2 {offsets = [2, 0], sizes = [1, 256], strides = [1, 1]} : vector<8x256xf32> to vector<1x256xf32>
    %6 = vector.extract_strided_slice %2 {offsets = [3, 0], sizes = [1, 256], strides = [1, 1]} : vector<8x256xf32> to vector<1x256xf32>
    %7 = vector.extract_strided_slice %2 {offsets = [4, 0], sizes = [1, 128], strides = [1, 1]} : vector<8x256xf32> to vector<1x128xf32>
    %8 = vector.extract_strided_slice %2 {offsets = [5, 0], sizes = [1, 128], strides = [1, 1]} : vector<8x256xf32> to vector<1x128xf32>
    %9 = vector.extract_strided_slice %2 {offsets = [6, 0], sizes = [1, 128], strides = [1, 1]} : vector<8x256xf32> to vector<1x128xf32>
    %10 = vector.extract_strided_slice %2 {offsets = [7, 0], sizes = [1, 128], strides = [1, 1]} : vector<8x256xf32> to vector<1x128xf32>
    %c0_3 = arith.constant 0 : index
    %c0_4 = arith.constant 0 : index
    %11 = vector.load %arg1[%c0_3, %c0_4] : memref<32x256xbf16, #tpu.memory_space<vmem>>, vector<32x256xbf16>
    %cst = arith.constant dense<0.000000e+00> : vector<8x256xf32>
    %12 = tpu.matmul %1, %11, %cst {dimension_numbers = #tpu.dot_dimension_numbers<[1], [0], [0], [1], [0, 0, 1, 1], [], []>} : vector<8x32xbf16>, vector<32x256xbf16>, vector<8x256xf32> -> vector<8x256xf32>
    %cst_5 = arith.constant dense<0.000000e+00> : vector<256xf32>
    %13 = vector.multi_reduction <add>, %12, %cst_5 [0] : vector<8x256xf32> to vector<256xf32>
    %14 = vector.shape_cast %13 : vector<256xf32> to vector<1x256xf32>
    %cst_6 = arith.constant 1.250000e-01 : f32
    %15 = vector.broadcast %cst_6 : f32 to vector<1x256xf32>
    %16 = arith.mulf %14, %15 : vector<1x256xf32>
    %17 = arith.mulf %12, %12 : vector<8x256xf32>
    %cst_7 = arith.constant dense<0.000000e+00> : vector<256xf32>
    %18 = vector.multi_reduction <add>, %17, %cst_7 [0] : vector<8x256xf32> to vector<256xf32>
    %19 = vector.shape_cast %18 : vector<256xf32> to vector<1x256xf32>
    %cst_8 = arith.constant 1.250000e-01 : f32
    %20 = vector.broadcast %cst_8 : f32 to vector<1x256xf32>
    %21 = arith.mulf %19, %20 : vector<1x256xf32>
    %22 = arith.mulf %16, %16 : vector<1x256xf32>
    %23 = arith.subf %21, %22 : vector<1x256xf32>
    %cst_9 = arith.constant 0.000000e+00 : f32
    %24 = vector.broadcast %cst_9 : f32 to vector<1x256xf32>
    %25 = arith.maximumf %23, %24 : vector<1x256xf32>
    %cst_10 = arith.constant 9.99999974E-6 : f32
    %26 = vector.broadcast %cst_10 : f32 to vector<1x256xf32>
    %27 = arith.addf %25, %26 : vector<1x256xf32>
    %28 = math.rsqrt %27 : vector<1x256xf32>
    %29 = arith.mulf %3, %28 : vector<1x256xf32>
    %30 = arith.mulf %16, %29 : vector<1x256xf32>
    %31 = arith.subf %4, %30 : vector<1x256xf32>
    %32 = vector.broadcast %29 : vector<1x256xf32> to vector<8x256xf32>
    %33 = arith.mulf %12, %32 : vector<8x256xf32>
    %34 = vector.broadcast %31 : vector<1x256xf32> to vector<8x256xf32>
    %35 = arith.addf %33, %34 : vector<8x256xf32>
    %cst_11 = arith.constant 0.000000e+00 : f32
    %36 = vector.broadcast %cst_11 : f32 to vector<8x256xf32>
    %37 = arith.maximumf %35, %36 : vector<8x256xf32>
    %38 = arith.truncf %37 : vector<8x256xf32> to vector<8x256xbf16>
    %c0_12 = arith.constant 0 : index
    %c0_13 = arith.constant 0 : index
    %39 = vector.load %arg2[%c0_12, %c0_13] : memref<256x256xbf16, #tpu.memory_space<vmem>>, vector<256x256xbf16>
    %cst_14 = arith.constant dense<0.000000e+00> : vector<8x256xf32>
    %40 = tpu.matmul %38, %39, %cst_14 {dimension_numbers = #tpu.dot_dimension_numbers<[1], [0], [0], [1], [0, 0, 1, 1], [], []>} : vector<8x256xbf16>, vector<256x256xbf16>, vector<8x256xf32> -> vector<8x256xf32>
    %cst_15 = arith.constant dense<0.000000e+00> : vector<256xf32>
    %41 = vector.multi_reduction <add>, %40, %cst_15 [0] : vector<8x256xf32> to vector<256xf32>
    %42 = vector.shape_cast %41 : vector<256xf32> to vector<1x256xf32>
    %cst_16 = arith.constant 1.250000e-01 : f32
    %43 = vector.broadcast %cst_16 : f32 to vector<1x256xf32>
    %44 = arith.mulf %42, %43 : vector<1x256xf32>
    %45 = arith.mulf %40, %40 : vector<8x256xf32>
    %cst_17 = arith.constant dense<0.000000e+00> : vector<256xf32>
    %46 = vector.multi_reduction <add>, %45, %cst_17 [0] : vector<8x256xf32> to vector<256xf32>
    %47 = vector.shape_cast %46 : vector<256xf32> to vector<1x256xf32>
    %cst_18 = arith.constant 1.250000e-01 : f32
    %48 = vector.broadcast %cst_18 : f32 to vector<1x256xf32>
    %49 = arith.mulf %47, %48 : vector<1x256xf32>
    %50 = arith.mulf %44, %44 : vector<1x256xf32>
    %51 = arith.subf %49, %50 : vector<1x256xf32>
    %cst_19 = arith.constant 0.000000e+00 : f32
    %52 = vector.broadcast %cst_19 : f32 to vector<1x256xf32>
    %53 = arith.maximumf %51, %52 : vector<1x256xf32>
    %cst_20 = arith.constant 9.99999974E-6 : f32
    %54 = vector.broadcast %cst_20 : f32 to vector<1x256xf32>
    %55 = arith.addf %53, %54 : vector<1x256xf32>
    %56 = math.rsqrt %55 : vector<1x256xf32>
    %57 = arith.mulf %5, %56 : vector<1x256xf32>
    %58 = arith.mulf %44, %57 : vector<1x256xf32>
    %59 = arith.subf %6, %58 : vector<1x256xf32>
    %60 = vector.broadcast %57 : vector<1x256xf32> to vector<8x256xf32>
    %61 = arith.mulf %40, %60 : vector<8x256xf32>
    %62 = vector.broadcast %59 : vector<1x256xf32> to vector<8x256xf32>
    %63 = arith.addf %61, %62 : vector<8x256xf32>
    %cst_21 = arith.constant 0.000000e+00 : f32
    %64 = vector.broadcast %cst_21 : f32 to vector<8x256xf32>
    %65 = arith.maximumf %63, %64 : vector<8x256xf32>
    %66 = arith.truncf %65 : vector<8x256xf32> to vector<8x256xbf16>
    %c0_22 = arith.constant 0 : index
    %c0_23 = arith.constant 0 : index
    %67 = vector.load %arg3[%c0_22, %c0_23] : memref<256x128xbf16, #tpu.memory_space<vmem>>, vector<256x128xbf16>
    %cst_24 = arith.constant dense<0.000000e+00> : vector<8x128xf32>
    %68 = tpu.matmul %66, %67, %cst_24 {dimension_numbers = #tpu.dot_dimension_numbers<[1], [0], [0], [1], [0, 0, 1, 1], [], []>} : vector<8x256xbf16>, vector<256x128xbf16>, vector<8x128xf32> -> vector<8x128xf32>
    %cst_25 = arith.constant dense<0.000000e+00> : vector<128xf32>
    %69 = vector.multi_reduction <add>, %68, %cst_25 [0] : vector<8x128xf32> to vector<128xf32>
    %70 = vector.shape_cast %69 : vector<128xf32> to vector<1x128xf32>
    %cst_26 = arith.constant 1.250000e-01 : f32
    %71 = vector.broadcast %cst_26 : f32 to vector<1x128xf32>
    %72 = arith.mulf %70, %71 : vector<1x128xf32>
    %73 = arith.mulf %68, %68 : vector<8x128xf32>
    %cst_27 = arith.constant dense<0.000000e+00> : vector<128xf32>
    %74 = vector.multi_reduction <add>, %73, %cst_27 [0] : vector<8x128xf32> to vector<128xf32>
    %75 = vector.shape_cast %74 : vector<128xf32> to vector<1x128xf32>
    %cst_28 = arith.constant 1.250000e-01 : f32
    %76 = vector.broadcast %cst_28 : f32 to vector<1x128xf32>
    %77 = arith.mulf %75, %76 : vector<1x128xf32>
    %78 = arith.mulf %72, %72 : vector<1x128xf32>
    %79 = arith.subf %77, %78 : vector<1x128xf32>
    %cst_29 = arith.constant 0.000000e+00 : f32
    %80 = vector.broadcast %cst_29 : f32 to vector<1x128xf32>
    %81 = arith.maximumf %79, %80 : vector<1x128xf32>
    %cst_30 = arith.constant 9.99999974E-6 : f32
    %82 = vector.broadcast %cst_30 : f32 to vector<1x128xf32>
    %83 = arith.addf %81, %82 : vector<1x128xf32>
    %84 = math.rsqrt %83 : vector<1x128xf32>
    %85 = arith.mulf %7, %84 : vector<1x128xf32>
    %86 = arith.mulf %72, %85 : vector<1x128xf32>
    %87 = arith.subf %8, %86 : vector<1x128xf32>
    %88 = vector.broadcast %85 : vector<1x128xf32> to vector<8x128xf32>
    %89 = arith.mulf %68, %88 : vector<8x128xf32>
    %90 = vector.broadcast %87 : vector<1x128xf32> to vector<8x128xf32>
    %91 = arith.addf %89, %90 : vector<8x128xf32>
    %cst_31 = arith.constant 0.000000e+00 : f32
    %92 = vector.broadcast %cst_31 : f32 to vector<8x128xf32>
    %93 = arith.maximumf %91, %92 : vector<8x128xf32>
    %94 = vector.broadcast %9 : vector<1x128xf32> to vector<8x128xf32>
    %95 = arith.mulf %93, %94 : vector<8x128xf32>
    %cst_32 = arith.constant dense<0.000000e+00> : vector<8xf32>
    %96 = vector.multi_reduction <add>, %95, %cst_32 [1] : vector<8x128xf32> to vector<8xf32>
    %97 = vector.shape_cast %96 : vector<8xf32> to vector<8x1xf32>
    %98 = vector.broadcast %97 : vector<8x1xf32> to vector<8x128xf32>
    %99 = vector.broadcast %10 : vector<1x128xf32> to vector<8x128xf32>
    %100 = arith.addf %98, %99 : vector<8x128xf32>
    %101 = arith.negf %100 : vector<8x128xf32>
    %102 = math.exp %101 : vector<8x128xf32>
    %cst_33 = arith.constant 1.000000e+00 : f32
    %103 = vector.broadcast %cst_33 : f32 to vector<8x128xf32>
    %104 = arith.addf %103, %102 : vector<8x128xf32>
    %105 = arith.divf %103, %104 : vector<8x128xf32>
    %c0_34 = arith.constant 0 : index
    %c0_35 = arith.constant 0 : index
    %106 = vector.load %arg5[%c0_34, %c0_35] : memref<8x128xf32, #tpu.memory_space<vmem>>, vector<8x128xf32>
    tpu.vector_store %arg5[%c0_34, %c0_35], %105 {strides = array<i32>} : memref<8x128xf32, #tpu.memory_space<vmem>>, vector<8x128xf32>,
    return
  }
}

</mosaic_0001>

<llo_original>
// kernel: tpu_custom_call.1
$region0: #{tpu_custom_call.1}
  #allocation0 [shape = 'u32[]', space=smem, size = 0x4, offset = 0x4, fixed_abs, tag = 'smem constant byte address 0x4 - core index']
  #allocation1 [shape = 'u32[144,128]{1,0:T(1,128)}', space=vmem, size = 0x12000, scoped, tag = 'internal scratch']
  %s0 = inlined_call_operand.hbm [shape: f32[8,32], index: 0, kind: input, shape index: {}]
  %s1 = inlined_call_operand.hbm [shape: bf16[32,256], index: 1, kind: input, shape index: {}]
  %s2 = inlined_call_operand.hbm [shape: bf16[256,256], index: 2, kind: input, shape index: {}]
  %s3 = inlined_call_operand.hbm [shape: bf16[256,128], index: 3, kind: input, shape index: {}]
  %s4 = inlined_call_operand.hbm [shape: f32[8,256], index: 4, kind: input, shape index: {}]
  %s5 = inlined_call_operand.hbm [shape: f32[8,128], index: 5, kind: output, shape index: {}]
  %s6 = sld [smem:[#allocation0]]
  $region50: #{tpu_custom_call.1} parent=0
    _
  %s8 = ssub.s32 1, %s6
  %s9 = scalar_select 0, %s8, %s6
  $region1: #{tpu_custom_call.1} parent=0
    #allocation2 [shape = 'u8[4096]{0}', space=vmem, size = 0x1000, scoped, tag = 'input window, operand 0, single buffered']
    #allocation3 [shape = 's32[1]{0}', space=sflag, size = 0x4, scoped, tag = 'scoped memory for tpu_custom_call.1']
    #allocation4 [shape = 's32[1]{0}', space=sflag, size = 0x4, scoped, tag = 'scoped memory for tpu_custom_call.1']
    #allocation5 [shape = 'u8[16384]{0}', space=vmem, size = 0x4000, scoped, tag = 'input window, operand 1, single buffered']
    #allocation6 [shape = 's32[1]{0}', space=sflag, size = 0x4, scoped, tag = 'scoped memory for tpu_custom_call.1']
    #allocation7 [shape = 'u8[131072]{0}', space=vmem, size = 0x20000, scoped, tag = 'input window, operand 2, single buffered']
    #allocation8 [shape = 'u8[65536]{0}', space=vmem, size = 0x10000, scoped, tag = 'input window, operand 3, single buffered']
    #allocation9 [shape = 's32[1]{0}', space=sflag, size = 0x4, scoped, tag = 'scoped memory for tpu_custom_call.1']
    #allocation10 [shape = 'u8[8192]{0}', space=vmem, size = 0x2000, scoped, tag = 'input window, operand 4, single buffered']
    #allocation11 [shape = 'u8[4096]{0}', space=vmem, size = 0x1000, scoped, tag = 'output window, operand 0, single buffered']
    %10 = vsyncpa [#allocation3], 0
    %11 = vsyncpa [#allocation6], 0
    %12 = vsyncpa [#allocation9], 0
    %13 = vsyncpa [#allocation4], 0
    // Predicated region
    $region2: #{tpu_custom_call.1} parent=1 // pred_check
      _
    $region3: #{tpu_custom_call.1} parent=1 // pred_check_branch
      %15 = sbr.rel (0) target = $region5
    $region4: #{tpu_custom_call.1} parent=1 // pred_region
      %s17 = ssub.s32 128, 128
      %18 = vsyncadd [#allocation3], %s17
      %s20 = sshll.u32 [#allocation2], 4
      %s21 = int_to_ptr.vmem [resolvable:$true] %s20
      %23 = dma.hbm_to_vmem [thread:$0]  %s0, 128, %s21, [#allocation3]
    $region5: #{tpu_custom_call.1} parent=1 // pred_fallthru
      _
    // Predicated region
    $region6: #{tpu_custom_call.1} parent=1 // pred_check
      _
    $region7: #{tpu_custom_call.1} parent=1 // pred_check_branch
      %25 = sbr.rel (0) target = $region9
    $region8: #{tpu_custom_call.1} parent=1 // pred_region
      %s27 = ssub.s32 512, 512
      %28 = vsyncadd [#allocation6], %s27
      %s29 = sshll.u32 [#allocation5], 4
      %s30 = int_to_ptr.vmem [resolvable:$true] %s29
      %35 = dma.hbm_to_vmem [thread:$0]  %s1, 512, %s30, [#allocation6], 128, 128, 8
    $region9: #{tpu_custom_call.1} parent=1 // pred_fallthru
      _
    // Predicated region
    $region10: #{tpu_custom_call.1} parent=1 // pred_check
      _
    $region11: #{tpu_custom_call.1} parent=1 // pred_check_branch
      %37 = sbr.rel (0) target = $region13
    $region12: #{tpu_custom_call.1} parent=1 // pred_region
      %s39 = ssub.s32 4096, 4096
      %40 = vsyncadd [#allocation6], %s39
      %s41 = sshll.u32 [#allocation7], 4
      %s42 = int_to_ptr.vmem [resolvable:$true] %s41
      %47 = dma.hbm_to_vmem [thread:$0]  %s2, 4096, %s42, [#allocation6], 128, 128, 8
    $region13: #{tpu_custom_call.1} parent=1 // pred_fallthru
      _
    // Predicated region
    $region14: #{tpu_custom_call.1} parent=1 // pred_check
      _
    $region15: #{tpu_custom_call.1} parent=1 // pred_check_branch
      %49 = sbr.rel (0) target = $region17
    $region16: #{tpu_custom_call.1} parent=1 // pred_region
      %s51 = ssub.s32 2048, 2048
      %52 = vsyncadd [#allocation9], %s51
      %s53 = sshll.u32 [#allocation8], 4
      %s54 = int_to_ptr.vmem [resolvable:$true] %s53
      %59 = dma.hbm_to_vmem [thread:$0]  %s3, 2048, %s54, [#allocation9], 64, 64, 4
    $region17: #{tpu_custom_call.1} parent=1 // pred_fallthru
      _
    // Predicated region
    $region18: #{tpu_custom_call.1} parent=1 // pred_check
      _
    $region19: #{tpu_custom_call.1} parent=1 // pred_check_branch
      %61 = sbr.rel (0) target = $region21
    $region20: #{tpu_custom_call.1} parent=1 // pred_region
      %s63 = ssub.s32 256, 256
      %64 = vsyncadd [#allocation9], %s63
      %s66 = sshll.u32 [#allocation10], 4
      %s67 = int_to_ptr.vmem [resolvable:$true] %s66
      %69 = dma.hbm_to_vmem [thread:$0]  %s4, 256, %s67, [#allocation9]
    $region21: #{tpu_custom_call.1} parent=1 // pred_fallthru
      _
    // Predicated region
    $region22: #{tpu_custom_call.1} parent=1 // pred_check
      _
    $region23: #{tpu_custom_call.1} parent=1 // pred_check_branch
      %71 = sbr.rel (0) target = $region25
    $region24: #{tpu_custom_call.1} parent=1 // pred_region
      %72 = dma.done [#allocation3], 128
    $region25: #{tpu_custom_call.1} parent=1 // pred_fallthru
      _
    // Predicated region
    $region26: #{tpu_custom_call.1} parent=1 // pred_check
      _
    $region27: #{tpu_custom_call.1} parent=1 // pred_check_branch
      %74 = sbr.rel (0) target = $region29
    $region28: #{tpu_custom_call.1} parent=1 // pred_region
      %75 = dma.done [#allocation6], 512
    $region29: #{tpu_custom_call.1} parent=1 // pred_fallthru
      _
    // Predicated region
    $region30: #{tpu_custom_call.1} parent=1 // pred_check
      _
    $region31: #{tpu_custom_call.1} parent=1 // pred_check_branch
      %77 = sbr.rel (0) target = $region33
    $region32: #{tpu_custom_call.1} parent=1 // pred_region
      %78 = dma.done [#allocation6], 4096
    $region33: #{tpu_custom_call.1} parent=1 // pred_fallthru
      _
    // Predicated region
    $region34: #{tpu_custom_call.1} parent=1 // pred_check
      _
    $region35: #{tpu_custom_call.1} parent=1 // pred_check_branch
      %80 = sbr.rel (0) target = $region37
    $region36: #{tpu_custom_call.1} parent=1 // pred_region
      %81 = dma.done [#allocation9], 2048
    $region37: #{tpu_custom_call.1} parent=1 // pred_fallthru
      _
    // Predicated region
    $region38: #{tpu_custom_call.1} parent=1 // pred_check
      _
    $region39: #{tpu_custom_call.1} parent=1 // pred_check_branch
      %83 = sbr.rel (0) target = $region41
    $region40: #{tpu_custom_call.1} parent=1 // pred_region
      %84 = dma.done [#allocation9], 256
    $region41: #{tpu_custom_call.1} parent=1 // pred_fallthru
      _
    %v86 = vld [vmem:[#allocation2] sm:$0xff]
    %v87 = vpack.c.bf16 %v86, %v86
    %v88 = vld [vmem:[#allocation10] sm:$0xff]
    %v89 = vld [vmem:[#allocation10 + $0x8] sm:$0xff]
    %v90 = vld [vmem:[#allocation5] sm:$0xff]
    %v91 = vld [vmem:[#allocation5 + $0x8] sm:$0xff]
    %v92 = vld [vmem:[#allocation5 + $0x10] sm:$0xff]
    %v93 = vld [vmem:[#allocation5 + $0x18] sm:$0xff]
    %v98 = vunpack.c.l.b16 %v90
    %v99 = vunpack.c.h.b16 %v90
    %v100 = vunpack.c.l.b16 %v91
    %v101 = vunpack.c.h.b16 %v91
    %v102 = vunpack.c.l.b16 %v92
    %v103 = vunpack.c.h.b16 %v92
    %v104 = vunpack.c.l.b16 %v93
    %v105 = vunpack.c.h.b16 %v93
    %v106 = vpack.c.b16 %v100, %v98
    %v107 = vpack.c.b16 %v101, %v99
    %v108 = vpack.c.b16 %v104, %v102
    %v109 = vpack.c.b16 %v105, %v103
    %vm114 = vcmask 261120
    %v116 = vsel %vm114, %v87, 0
    %118 = vmatprep.subr.bf16.mxu0 %v107
    %119 = vmatpush1.bf16.msra.mxu0 %v106
    %120 = vmatprep.subr.bf16.mxu0 %v109
    %121 = vmatpush1.bf16.msra.mxu0 %v108
    %122 = vmatprep.subr.bf16.mxu0 0
    %123 = vmatpush1.bf16.msra.mxu0 0
    %124 = vmatprep.subr.bf16.mxu0 0
    %125 = vmatpush1.bf16.msra.mxu0 0
    %126 = vmatprep.subr.bf16.mxu0 0
    %127 = vmatpush1.bf16.msra.mxu0 0
    %128 = vmatprep.subr.bf16.mxu0 0
    %129 = vmatpush1.bf16.msra.mxu0 0
    %130 = vmatprep.subr.bf16.mxu0 0
    %131 = vmatpush1.bf16.msra.mxu0 0
    %132 = vmatprep.subr.bf16.mxu0 0
    %133 = vmatpush1.bf16.msra.mxu0 0
    %134 = vmatprep.subr.bf16.mxu0 0
    %135 = vmatpush1.bf16.msra.mxu0 0
    %136 = vmatprep.subr.bf16.mxu0 0
    %137 = vmatpush1.bf16.msra.mxu0 0
    %138 = vmatprep.subr.bf16.mxu0 0
    %139 = vmatpush1.bf16.msra.mxu0 0
    %140 = vmatprep.subr.bf16.mxu0 0
    %141 = vmatpush1.bf16.msra.mxu0 0
    %142 = vmatprep.subr.bf16.mxu0 0
    %143 = vmatpush1.bf16.msra.mxu0 0
    %144 = vmatprep.subr.bf16.mxu0 0
    %145 = vmatpush1.bf16.msra.mxu0 0
    %146 = vmatprep.subr.bf16.mxu0 0
    %147 = vmatpush1.bf16.msra.mxu0 0
    %148 = vmatprep.subr.bf16.mxu0 0
    %149 = vmatpush1.bf16.msra.mxu0 0
    %150 = vmatprep.mubr.bf16.mxu0 0
    %151 = vmatmul.mubr.bf16.gmra.mrb[0].mxu0 %v116
    %v152 = vpop.f32.mrb[0].mxu0
    %v153 = vadd.f32 0.0, %v152
    %v154 = vpop.f32.mrb[0].mxu0
    %v155 = vadd.f32 0.0, %v154
    %v156 = vpop.f32.mrb[0].mxu0
    %v157 = vpop.f32.mrb[0].mxu0
    %158 = vdwg.mxu0
    %v159 = vrot.slane %v153, 4
    %v160 = vadd.f32 %v153, %v159
    %v161 = vrot.slane %v160, 2
    %v162 = vadd.f32 %v160, %v161
    %v163 = vrot.slane %v162, 1
    %v164 = vadd.f32 %v162, %v163
    %v165 = vrot.slane %v155, 4
    %v166 = vadd.f32 %v155, %v165
    %v167 = vrot.slane %v166, 2
    %v168 = vadd.f32 %v166, %v167
    %v169 = vrot.slane %v168, 1
    %v170 = vadd.f32 %v168, %v169
    %v171 = vmul.f32 %v164, 0.125
    %v172 = vmul.f32 %v170, 0.125
    %v173 = vmul.f32 %v153, %v153
    %v174 = vmul.f32 %v155, %v155
    %v175 = vrot.slane %v173, 4
    %v176 = vadd.f32 %v173, %v175
    %v177 = vrot.slane %v176, 2
    %v178 = vadd.f32 %v176, %v177
    %v179 = vrot.slane %v178, 1
    %v180 = vadd.f32 %v178, %v179
    %v181 = vrot.slane %v174, 4
    %v182 = vadd.f32 %v174, %v181
    %v183 = vrot.slane %v182, 2
    %v184 = vadd.f32 %v182, %v183
    %v185 = vrot.slane %v184, 1
    %v186 = vadd.f32 %v184, %v185
    %v187 = vmul.f32 %v180, 0.125
    %v188 = vmul.f32 %v186, 0.125
    %v189 = vmul.f32 %v171, %v171
    %v190 = vmul.f32 %v172, %v172
    %v191 = vsub.f32 %v187, %v189
    %v192 = vsub.f32 %v188, %v190
    %v193 = vmax.f32 %v191, 0.0
    %v194 = vmax.f32 %v192, 0.0
    %v195 = vadd.f32 %v193, 1e-05
    %v196 = vadd.f32 %v194, 1e-05
    %v197 = vrsqrt.pop %v195
    %v198 = vrsqrt.pop %v196
    %v199 = vmul.f32 %v88, %v197
    %v200 = vmul.f32 %v89, %v198
    %v201 = vmul.f32 %v171, %v199
    %v202 = vmul.f32 %v172, %v200
    %v205 = vrot.slane %v201, 7
    %v206 = vrot.slane %v202, 7
    %v209 = vsub.f32 %v88, %v205
    %v210 = vsub.f32 %v89, %v206
    %v211 = vlaneseq
    %v212 = vshrl.u32 %v211, 7
    %v213 = vsub.s32 0, %v212
    %v214 = vrot.slane %v199, %v213
    %v215 = vlaneseq
    %v216 = vshrl.u32 %v215, 7
    %v217 = vsub.s32 0, %v216
    %v218 = vrot.slane %v200, %v217
    %v219 = vmul.f32 %v153, %v214
    %v220 = vmul.f32 %v155, %v218
    %v221 = vlaneseq
    %v222 = vshrl.u32 %v221, 7
    %v223 = vsub.s32 1, %v222
    %v224 = vrot.slane %v209, %v223
    %v225 = vlaneseq
    %v226 = vshrl.u32 %v225, 7
    %v227 = vsub.s32 1, %v226
    %v228 = vrot.slane %v210, %v227
    %v229 = vadd.f32 %v219, %v224
    %v230 = vadd.f32 %v220, %v228
    %v231 = vmax.f32 %v229, 0.0
    %v232 = vmax.f32 %v230, 0.0
    %v233 = vpack.c.bf16 %v231, %v231
    %v234 = vpack.c.bf16 %v232, %v232
    %v235 = vld [vmem:[#allocation7] sm:$0xff]
    %v236 = vld [vmem:[#allocation7 + $0x8] sm:$0xff]
    %v237 = vld [vmem:[#allocation7 + $0x10] sm:$0xff]
    %v238 = vld [vmem:[#allocation7 + $0x18] sm:$0xff]
    %v239 = vld [vmem:[#allocation7 + $0x20] sm:$0xff]
    %v240 = vld [vmem:[#allocation7 + $0x28] sm:$0xff]
    %v241 = vld [vmem:[#allocation7 + $0x30] sm:$0xff]
    %v242 = vld [vmem:[#allocation7 + $0x38] sm:$0xff]
    %v243 = vld [vmem:[#allocation7 + $0x40] sm:$0xff]
    %v244 = vld [vmem:[#allocation7 + $0x48] sm:$0xff]
    %v245 = vld [vmem:[#allocation7 + $0x50] sm:$0xff]
    %v246 = vld [vmem:[#allocation7 + $0x58] sm:$0xff]
    %v247 = vld [vmem:[#allocation7 + $0x60] sm:$0xff]
    %v248 = vld [vmem:[#allocation7 + $0x68] sm:$0xff]
    %v249 = vld [vmem:[#allocation7 + $0x70] sm:$0xff]
    %v250 = vld [vmem:[#allocation7 + $0x78] sm:$0xff]
    %v251 = vld [vmem:[#allocation7 + $0x80] sm:$0xff]
    %v252 = vld [vmem:[#allocation7 + $0x88] sm:$0xff]
    %v253 = vld [vmem:[#allocation7 + $0x90] sm:$0xff]
    %v254 = vld [vmem:[#allocation7 + $0x98] sm:$0xff]
    %v255 = vld [vmem:[#allocation7 + $0xa0] sm:$0xff]
    %v256 = vld [vmem:[#allocation7 + $0xa8] sm:$0xff]
    %v257 = vld [vmem:[#allocation7 + $0xb0] sm:$0xff]
    %v258 = vld [vmem:[#allocation7 + $0xb8] sm:$0xff]
    %v259 = vld [vmem:[#allocation7 + $0xc0] sm:$0xff]
    %v260 = vld [vmem:[#allocation7 + $0xc8] sm:$0xff]
    %v261 = vld [vmem:[#allocation7 + $0xd0] sm:$0xff]
    %v262 = vld [vmem:[#allocation7 + $0xd8] sm:$0xff]
    %v263 = vld [vmem:[#allocation7 + $0xe0] sm:$0xff]
    %v264 = vld [vmem:[#allocation7 + $0xe8] sm:$0xff]
    %v265 = vld [vmem:[#allocation7 + $0xf0] sm:$0xff]
    %v266 = vld [vmem:[#allocation7 + $0xf8] sm:$0xff]
    %v299 = vunpack.c.l.b16 %v235
    %v300 = vunpack.c.h.b16 %v235
    %v301 = vunpack.c.l.b16 %v236
    %v302 = vunpack.c.h.b16 %v236
    %v303 = vunpack.c.l.b16 %v237
    %v304 = vunpack.c.h.b16 %v237
    %v305 = vunpack.c.l.b16 %v238
    %v306 = vunpack.c.h.b16 %v238
    %v307 = vunpack.c.l.b16 %v239
    %v308 = vunpack.c.h.b16 %v239
    %v309 = vunpack.c.l.b16 %v240
    %v310 = vunpack.c.h.b16 %v240
    %v311 = vunpack.c.l.b16 %v241
    %v312 = vunpack.c.h.b16 %v241
    %v313 = vunpack.c.l.b16 %v242
    %v314 = vunpack.c.h.b16 %v242
    %v315 = vunpack.c.l.b16 %v243
    %v316 = vunpack.c.h.b16 %v243
    %v317 = vunpack.c.l.b16 %v244
    %v318 = vunpack.c.h.b16 %v244
    %v319 = vunpack.c.l.b16 %v245
    %v320 = vunpack.c.h.b16 %v245
    %v321 = vunpack.c.l.b16 %v246
    %v322 = vunpack.c.h.b16 %v246
    %v323 = vunpack.c.l.b16 %v247
    %v324 = vunpack.c.h.b16 %v247
    %v325 = vunpack.c.l.b16 %v248
    %v326 = vunpack.c.h.b16 %v248
    %v327 = vunpack.c.l.b16 %v249
    %v328 = vunpack.c.h.b16 %v249
    %v329 = vunpack.c.l.b16 %v250
    %v330 = vunpack.c.h.b16 %v250
    %v331 = vunpack.c.l.b16 %v251
    %v332 = vunpack.c.h.b16 %v251
    %v333 = vunpack.c.l.b16 %v252
    %v334 = vunpack.c.h.b16 %v252
    %v335 = vunpack.c.l.b16 %v253
    %v336 = vunpack.c.h.b16 %v253
    %v337 = vunpack.c.l.b16 %v254
    %v338 = vunpack.c.h.b16 %v254
    %v339 = vunpack.c.l.b16 %v255
    %v340 = vunpack.c.h.b16 %v255
    %v341 = vunpack.c.l.b16 %v256
    %v342 = vunpack.c.h.b16 %v256
    %v343 = vunpack.c.l.b16 %v257
    %v344 = vunpack.c.h.b16 %v257
    %v345 = vunpack.c.l.b16 %v258
    %v346 = vunpack.c.h.b16 %v258
    %v347 = vunpack.c.l.b16 %v259
    %v348 = vunpack.c.h.b16 %v259
    %v349 = vunpack.c.l.b16 %v260
    %v350 = vunpack.c.h.b16 %v260
    %v351 = vunpack.c.l.b16 %v261
    %v352 = vunpack.c.h.b16 %v261
    %v353 = vunpack.c.l.b16 %v262
    %v354 = vunpack.c.h.b16 %v262
    %v355 = vunpack.c.l.b16 %v263
    %v356 = vunpack.c.h.b16 %v263
    %v357 = vunpack.c.l.b16 %v264
    %v358 = vunpack.c.h.b16 %v264
    %v359 = vunpack.c.l.b16 %v265
    %v360 = vunpack.c.h.b16 %v265
    %v361 = vunpack.c.l.b16 %v266
    %v362 = vunpack.c.h.b16 %v266
    %v363 = vpack.c.b16 %v301, %v299
    %v364 = vpack.c.b16 %v302, %v300
    %v365 = vpack.c.b16 %v305, %v303
    %v366 = vpack.c.b16 %v306, %v304
    %v367 = vpack.c.b16 %v309, %v307
    %v368 = vpack.c.b16 %v310, %v308
    %v369 = vpack.c.b16 %v313, %v311
    %v370 = vpack.c.b16 %v314, %v312
    %v371 = vpack.c.b16 %v317, %v315
    %v372 = vpack.c.b16 %v318, %v316
    %v373 = vpack.c.b16 %v321, %v319
    %v374 = vpack.c.b16 %v322, %v320
    %v375 = vpack.c.b16 %v325, %v323
    %v376 = vpack.c.b16 %v326, %v324
    %v377 = vpack.c.b16 %v329, %v327
    %v378 = vpack.c.b16 %v330, %v328
    %v379 = vpack.c.b16 %v333, %v331
    %v380 = vpack.c.b16 %v334, %v332
    %v381 = vpack.c.b16 %v337, %v335
    %v382 = vpack.c.b16 %v338, %v336
    %v383 = vpack.c.b16 %v341, %v339
    %v384 = vpack.c.b16 %v342, %v340
    %v385 = vpack.c.b16 %v345, %v343
    %v386 = vpack.c.b16 %v346, %v344
    %v387 = vpack.c.b16 %v349, %v347
    %v388 = vpack.c.b16 %v350, %v348
    %v389 = vpack.c.b16 %v353, %v351
    %v390 = vpack.c.b16 %v354, %v352
    %v391 = vpack.c.b16 %v357, %v355
    %v392 = vpack.c.b16 %v358, %v356
    %v393 = vpack.c.b16 %v361, %v359
    %v394 = vpack.c.b16 %v362, %v360
    %427 = vmatprep.subr.bf16.mxu0 %v364
    %428 = vmatpush1.bf16.msra.mxu0 %v363
    %429 = vmatprep.subr.bf16.mxu0 %v366
    %430 = vmatpush1.bf16.msra.mxu0 %v365
    %431 = vmatprep.subr.bf16.mxu0 %v368
    %432 = vmatpush1.bf16.msra.mxu0 %v367
    %433 = vmatprep.subr.bf16.mxu0 %v370
    %434 = vmatpush1.bf16.msra.mxu0 %v369
    %435 = vmatprep.subr.bf16.mxu0 %v372
    %436 = vmatpush1.bf16.msra.mxu0 %v371
    %437 = vmatprep.subr.bf16.mxu0 %v374
    %438 = vmatpush1.bf16.msra.mxu0 %v373
    %439 = vmatprep.subr.bf16.mxu0 %v376
    %440 = vmatpush1.bf16.msra.mxu0 %v375
    %441 = vmatprep.subr.bf16.mxu0 %v378
    %442 = vmatpush1.bf16.msra.mxu0 %v377
    %443 = vmatprep.subr.bf16.mxu0 %v380
    %444 = vmatpush1.bf16.msra.mxu0 %v379
    %445 = vmatprep.subr.bf16.mxu0 %v382
    %446 = vmatpush1.bf16.msra.mxu0 %v381
    %447 = vmatprep.subr.bf16.mxu0 %v384
    %448 = vmatpush1.bf16.msra.mxu0 %v383
    %449 = vmatprep.subr.bf16.mxu0 %v386
    %450 = vmatpush1.bf16.msra.mxu0 %v385
    %451 = vmatprep.subr.bf16.mxu0 %v388
    %452 = vmatpush1.bf16.msra.mxu0 %v387
    %453 = vmatprep.subr.bf16.mxu0 %v390
    %454 = vmatpush1.bf16.msra.mxu0 %v389
    %455 = vmatprep.subr.bf16.mxu0 %v392
    %456 = vmatpush1.bf16.msra.mxu0 %v391
    %457 = vmatprep.subr.bf16.mxu0 %v394
    %458 = vmatpush1.bf16.msra.mxu0 %v393
    %459 = vmatprep.mubr.bf16.mxu0 %v234
    %460 = vmatmul.mubr.bf16.gmra.mrb[0].mxu0 %v233
    %v461 = vpop.f32.mrb[0].mxu0
    %v462 = vadd.f32 0.0, %v461
    %v463 = vpop.f32.mrb[0].mxu0
    %v464 = vadd.f32 0.0, %v463
    %v465 = vpop.f32.mrb[0].mxu0
    %v466 = vpop.f32.mrb[0].mxu0
    %467 = vdwg.mxu0
    %v468 = vrot.slane %v462, 4
    %v469 = vadd.f32 %v462, %v468
    %v470 = vrot.slane %v469, 2
    %v471 = vadd.f32 %v469, %v470
    %v472 = vrot.slane %v471, 1
    %v473 = vadd.f32 %v471, %v472
    %v474 = vrot.slane %v464, 4
    %v475 = vadd.f32 %v464, %v474
    %v476 = vrot.slane %v475, 2
    %v477 = vadd.f32 %v475, %v476
    %v478 = vrot.slane %v477, 1
    %v479 = vadd.f32 %v477, %v478
    %v480 = vmul.f32 %v473, 0.125
    %v481 = vmul.f32 %v479, 0.125
    %v482 = vmul.f32 %v462, %v462
    %v483 = vmul.f32 %v464, %v464
    %v484 = vrot.slane %v482, 4
    %v485 = vadd.f32 %v482, %v484
    %v486 = vrot.slane %v485, 2
    %v487 = vadd.f32 %v485, %v486
    %v488 = vrot.slane %v487, 1
    %v489 = vadd.f32 %v487, %v488
    %v490 = vrot.slane %v483, 4
    %v491 = vadd.f32 %v483, %v490
    %v492 = vrot.slane %v491, 2
    %v493 = vadd.f32 %v491, %v492
    %v494 = vrot.slane %v493, 1
    %v495 = vadd.f32 %v493, %v494
    %v496 = vmul.f32 %v489, 0.125
    %v497 = vmul.f32 %v495, 0.125
    %v498 = vmul.f32 %v480, %v480
    %v499 = vmul.f32 %v481, %v481
    %v500 = vsub.f32 %v496, %v498
    %v501 = vsub.f32 %v497, %v499
    %v502 = vmax.f32 %v500, 0.0
    %v503 = vmax.f32 %v501, 0.0
    %v504 = vadd.f32 %v502, 1e-05
    %v505 = vadd.f32 %v503, 1e-05
    %v506 = vrsqrt.pop %v504
    %v507 = vrsqrt.pop %v505
    %v508 = vmul.f32 %v88, %v506
    %v509 = vmul.f32 %v89, %v507
    %v510 = vmul.f32 %v480, %v508
    %v511 = vmul.f32 %v481, %v509
    %v514 = vrot.slane %v510, 7
    %v515 = vrot.slane %v511, 7
    %v518 = vsub.f32 %v88, %v514
    %v519 = vsub.f32 %v89, %v515
    %v520 = vlaneseq
    %v521 = vshrl.u32 %v520, 7
    %v522 = vsub.s32 2, %v521
    %v523 = vrot.slane %v508, %v522
    %v524 = vlaneseq
    %v525 = vshrl.u32 %v524, 7
    %v526 = vsub.s32 2, %v525
    %v527 = vrot.slane %v509, %v526
    %v528 = vmul.f32 %v462, %v523
    %v529 = vmul.f32 %v464, %v527
    %v530 = vlaneseq
    %v531 = vshrl.u32 %v530, 7
    %v532 = vsub.s32 3, %v531
    %v533 = vrot.slane %v518, %v532
    %v534 = vlaneseq
    %v535 = vshrl.u32 %v534, 7
    %v536 = vsub.s32 3, %v535
    %v537 = vrot.slane %v519, %v536
    %v538 = vadd.f32 %v528, %v533
    %v539 = vadd.f32 %v529, %v537
    %v540 = vmax.f32 %v538, 0.0
    %v541 = vmax.f32 %v539, 0.0
    %v542 = vpack.c.bf16 %v540, %v540
    %v543 = vpack.c.bf16 %v541, %v541
    %v544 = vld [vmem:[#allocation8] sm:$0xf]
    %v545 = vld [vmem:[#allocation8 + $0x4] sm:$0xf]
    %v546 = vld [vmem:[#allocation8 + $0x8] sm:$0xf]
    %v547 = vld [vmem:[#allocation8 + $0xc] sm:$0xf]
    %v548 = vld [vmem:[#allocation8 + $0x10] sm:$0xf]
    %v549 = vld [vmem:[#allocation8 + $0x14] sm:$0xf]
    %v550 = vld [vmem:[#allocation8 + $0x18] sm:$0xf]
    %v551 = vld [vmem:[#allocation8 + $0x1c] sm:$0xf]
    %v552 = vld [vmem:[#allocation8 + $0x20] sm:$0xf]
    %v553 = vld [vmem:[#allocation8 + $0x24] sm:$0xf]
    %v554 = vld [vmem:[#allocation8 + $0x28] sm:$0xf]
    %v555 = vld [vmem:[#allocation8 + $0x2c] sm:$0xf]
    %v556 = vld [vmem:[#allocation8 + $0x30] sm:$0xf]
    %v557 = vld [vmem:[#allocation8 + $0x34] sm:$0xf]
    %v558 = vld [vmem:[#allocation8 + $0x38] sm:$0xf]
    %v559 = vld [vmem:[#allocation8 + $0x3c] sm:$0xf]
    %v560 = vld [vmem:[#allocation8 + $0x40] sm:$0xf]
    %v561 = vld [vmem:[#allocation8 + $0x44] sm:$0xf]
    %v562 = vld [vmem:[#allocation8 + $0x48] sm:$0xf]
    %v563 = vld [vmem:[#allocation8 + $0x4c] sm:$0xf]
    %v564 = vld [vmem:[#allocation8 + $0x50] sm:$0xf]
    %v565 = vld [vmem:[#allocation8 + $0x54] sm:$0xf]
    %v566 = vld [vmem:[#allocation8 + $0x58] sm:$0xf]
    %v567 = vld [vmem:[#allocation8 + $0x5c] sm:$0xf]
    %v568 = vld [vmem:[#allocation8 + $0x60] sm:$0xf]
    %v569 = vld [vmem:[#allocation8 + $0x64] sm:$0xf]
    %v570 = vld [vmem:[#allocation8 + $0x68] sm:$0xf]
    %v571 = vld [vmem:[#allocation8 + $0x6c] sm:$0xf]
    %v572 = vld [vmem:[#allocation8 + $0x70] sm:$0xf]
    %v573 = vld [vmem:[#allocation8 + $0x74] sm:$0xf]
    %v574 = vld [vmem:[#allocation8 + $0x78] sm:$0xf]
    %v575 = vld [vmem:[#allocation8 + $0x7c] sm:$0xf]
    %v608 = vunpack.c.l.b16 %v544
    %v609 = vunpack.c.l.b16 %v545
    %v610 = vunpack.c.l.b16 %v546
    %v611 = vunpack.c.l.b16 %v547
    %v612 = vunpack.c.l.b16 %v548
    %v613 = vunpack.c.l.b16 %v549
    %v614 = vunpack.c.l.b16 %v550
    %v615 = vunpack.c.l.b16 %v551
    %v616 = vunpack.c.l.b16 %v552
    %v617 = vunpack.c.l.b16 %v553
    %v618 = vunpack.c.l.b16 %v554
    %v619 = vunpack.c.l.b16 %v555
    %v620 = vunpack.c.l.b16 %v556
    %v621 = vunpack.c.l.b16 %v557
    %v622 = vunpack.c.l.b16 %v558
    %v623 = vunpack.c.l.b16 %v559
    %v624 = vunpack.c.l.b16 %v560
    %v625 = vunpack.c.l.b16 %v561
    %v626 = vunpack.c.l.b16 %v562
    %v627 = vunpack.c.l.b16 %v563
    %v628 = vunpack.c.l.b16 %v564
    %v629 = vunpack.c.l.b16 %v565
    %v630 = vunpack.c.l.b16 %v566
    %v631 = vunpack.c.l.b16 %v567
    %v632 = vunpack.c.l.b16 %v568
    %v633 = vunpack.c.l.b16 %v569
    %v634 = vunpack.c.l.b16 %v570
    %v635 = vunpack.c.l.b16 %v571
    %v636 = vunpack.c.l.b16 %v572
    %v637 = vunpack.c.l.b16 %v573
    %v638 = vunpack.c.l.b16 %v574
    %v639 = vunpack.c.l.b16 %v575
    %v640 = vpack.c.b16 %v609, %v608
    %v641 = vpack.c.b16 %v611, %v610
    %v642 = vpack.c.b16 %v613, %v612
    %v643 = vpack.c.b16 %v615, %v614
    %v644 = vpack.c.b16 %v617, %v616
    %v645 = vpack.c.b16 %v619, %v618
    %v646 = vpack.c.b16 %v621, %v620
    %v647 = vpack.c.b16 %v623, %v622
    %v648 = vpack.c.b16 %v625, %v624
    %v649 = vpack.c.b16 %v627, %v626
    %v650 = vpack.c.b16 %v629, %v628
    %v651 = vpack.c.b16 %v631, %v630
    %v652 = vpack.c.b16 %v633, %v632
    %v653 = vpack.c.b16 %v635, %v634
    %v654 = vpack.c.b16 %v637, %v636
    %v655 = vpack.c.b16 %v639, %v638
    %672 = vmatprep.subr.bf16.mxu0 0
    %673 = vmatpush1.bf16.msra.mxu0 %v640
    %674 = vmatprep.subr.bf16.mxu0 0
    %675 = vmatpush1.bf16.msra.mxu0 %v641
    %676 = vmatprep.subr.bf16.mxu0 0
    %677 = vmatpush1.bf16.msra.mxu0 %v642
    %678 = vmatprep.subr.bf16.mxu0 0
    %679 = vmatpush1.bf16.msra.mxu0 %v643
    %680 = vmatprep.subr.bf16.mxu0 0
    %681 = vmatpush1.bf16.msra.mxu0 %v644
    %682 = vmatprep.subr.bf16.mxu0 0
    %683 = vmatpush1.bf16.msra.mxu0 %v645
    %684 = vmatprep.subr.bf16.mxu0 0
    %685 = vmatpush1.bf16.msra.mxu0 %v646
    %686 = vmatprep.subr.bf16.mxu0 0
    %687 = vmatpush1.bf16.msra.mxu0 %v647
    %688 = vmatprep.subr.bf16.mxu0 0
    %689 = vmatpush1.bf16.msra.mxu0 %v648
    %690 = vmatprep.subr.bf16.mxu0 0
    %691 = vmatpush1.bf16.msra.mxu0 %v649
    %692 = vmatprep.subr.bf16.mxu0 0
    %693 = vmatpush1.bf16.msra.mxu0 %v650
    %694 = vmatprep.subr.bf16.mxu0 0
    %695 = vmatpush1.bf16.msra.mxu0 %v651
    %696 = vmatprep.subr.bf16.mxu0 0
    %697 = vmatpush1.bf16.msra.mxu0 %v652
    %698 = vmatprep.subr.bf16.mxu0 0
    %699 = vmatpush1.bf16.msra.mxu0 %v653
    %700 = vmatprep.subr.bf16.mxu0 0
    %701 = vmatpush1.bf16.msra.mxu0 %v654
    %702 = vmatprep.subr.bf16.mxu0 0
    %703 = vmatpush1.bf16.msra.mxu0 %v655
    %704 = vmatprep.mubr.bf16.mxu0 %v543
    %705 = vmatmul.mubr.bf16.gmra.mrb[0].mxu0 %v542
    %v706 = vpop.f32.mrb[0].mxu0
    %v707 = vadd.f32 0.0, %v706
    %v708 = vpop.f32.mrb[0].mxu0
    %v709 = vpop.f32.mrb[0].mxu0
    %v710 = vpop.f32.mrb[0].mxu0
    %711 = vdwg.mxu0
    %v712 = vrot.slane %v707, 4
    %v713 = vadd.f32 %v707, %v712
    %v714 = vrot.slane %v713, 2
    %v715 = vadd.f32 %v713, %v714
    %v716 = vrot.slane %v715, 1
    %v717 = vadd.f32 %v715, %v716
    %v718 = vmul.f32 %v717, 0.125
    %v719 = vmul.f32 %v707, %v707
    %v720 = vrot.slane %v719, 4
    %v721 = vadd.f32 %v719, %v720
    %v722 = vrot.slane %v721, 2
    %v723 = vadd.f32 %v721, %v722
    %v724 = vrot.slane %v723, 1
    %v725 = vadd.f32 %v723, %v724
    %v726 = vmul.f32 %v725, 0.125
    %v727 = vmul.f32 %v718, %v718
    %v728 = vsub.f32 %v726, %v727
    %v729 = vmax.f32 %v728, 0.0
    %v730 = vadd.f32 %v729, 1e-05
    %v731 = vrsqrt.pop %v730
    %v732 = vmul.f32 %v88, %v731
    %v733 = vmul.f32 %v718, %v732
    %v735 = vrot.slane %v733, 7
    %v737 = vsub.f32 %v88, %v735
    %v738 = vlaneseq
    %v739 = vshrl.u32 %v738, 7
    %v740 = vsub.s32 4, %v739
    %v741 = vrot.slane %v732, %v740
    %v742 = vmul.f32 %v707, %v741
    %v743 = vlaneseq
    %v744 = vshrl.u32 %v743, 7
    %v745 = vsub.s32 5, %v744
    %v746 = vrot.slane %v737, %v745
    %v747 = vadd.f32 %v742, %v746
    %v748 = vmax.f32 %v747, 0.0
    %v749 = vlaneseq
    %v750 = vshrl.u32 %v749, 7
    %v751 = vsub.s32 6, %v750
    %v752 = vrot.slane %v88, %v751
    %v753 = vmul.f32 %v748, %v752
    %754 = vadd.xlane.f32.xlu0 %v753
    %v755 = vpop.xlane.xlu0 %754
    %v756 = vlaneseq
    %v757 = vshrl.u32 %v756, 7
    %v758 = vsub.s32 7, %v757
    %v759 = vrot.slane %v88, %v758
    %v760 = vadd.f32 %v755, %v759
    %v761 = vxor.u32 %v760, 2147483648
    %v762 = vmul.f32 %v761, 1.442695
    %v763 = vpow.pop %v762
    %v764 = vadd.f32 %v763, 1.0
    %v765 = vrcp.pop %v764
    %v766 = vmul.f32 1.0, %v765
    %767 = vst [vmem:[#allocation11] sm:$0xff] %v766
    // Predicated region
    $region42: #{tpu_custom_call.1} parent=1 // pred_check
      _
    $region43: #{tpu_custom_call.1} parent=1 // pred_check_branch
      %769 = sbr.rel (0) target = $region45
    $region44: #{tpu_custom_call.1} parent=1 // pred_region
      %s771 = ssub.s32 128, 128
      %772 = vsyncadd [#allocation4], %s771
      %s774 = sshll.u32 [#allocation11], 4
      %s775 = int_to_ptr.vmem [resolvable:$true] %s774
      %777 = dma.vmem_to_hbm [thread:$0]  %s775, 128, %s5, [#allocation4]
    $region45: #{tpu_custom_call.1} parent=1 // pred_fallthru
      _
    // Predicated region
    $region46: #{tpu_custom_call.1} parent=1 // pred_check
      _
    $region47: #{tpu_custom_call.1} parent=1 // pred_check_branch
      %779 = sbr.rel (0) target = $region49
    $region48: #{tpu_custom_call.1} parent=1 // pred_region
      %780 = dma.done [#allocation4], 128
    $region49: #{tpu_custom_call.1} parent=1 // pred_fallthru
      _
    %781 = vsyncpa [#allocation3], 1
    %782 = vsyncpa [#allocation6], 1
    %783 = vsyncpa [#allocation9], 1
    %784 = vsyncpa [#allocation4], 1

</llo_original>
